<compile_context>
chip_gen: v5e
topology: v5e:2x2
jax: 0.10.0
libtpu: 0.0.40
codegen_flags: <defaults>
</compile_context>

<pallas_src>
import jax
import jax.numpy as jnp
from jax import lax
from jax.experimental import pallas as pl
from jax.experimental.pallas import tpu as pltpu

# ---- small test config (stand-ins for cfg.*) --------------------------------
B = 2        # batch
T = 8        # cfg.TEXT.WORDS_NUM (sequence length)
VOCAB = 24   # ntoken
NINPUT = 32  # word-embedding dim (module default 300)
MDIM = 256   # memory_emb channel dim (hard-coded 256 in the module)
NHID = 32    # per-direction hidden = nhidden // num_directions


# --------------------------------------------------------------------------- #
# Kernel 1: Embedding lookup + tanh + 1x1 conv (bias-free).  All refs [B*T, F].
# --------------------------------------------------------------------------- #
def prep_kernel(ids_ref, table_ref, mem_ref, wcw_ref, wcm_ref, x_ref):
    ids = ids_ref[...]                                        # [BT, 1] int32
    bt = ids.shape[0]
    vocab = table_ref.shape[0]
    # Embedding gather as a one-hot matmul (MXU-friendly, no dynamic gather).
    onehot = (lax.broadcasted_iota(jnp.int32, (bt, vocab), 1) == ids)
    word = jnp.dot(onehot.astype(jnp.float32), table_ref[...],
                   preferred_element_type=jnp.float32)        # [BT, ninput]
    # tanh(cat(word, mem)) @ Wc^T  ==  tanh(word)@Wc_w + tanh(mem)@Wc_m
    xw = jnp.tanh(word)
    xm = jnp.tanh(mem_ref[...])
    x = (jnp.dot(xw, wcw_ref[...], preferred_element_type=jnp.float32) +
         jnp.dot(xm, wcm_ref[...], preferred_element_type=jnp.float32))
    # TODO(synk): nn.Dropout is identity in eval mode; training-mode dropout
    # (pltpu.prng_* Bernoulli mask) intentionally not applied here.
    x_ref[...] = x


# --------------------------------------------------------------------------- #
# Kernel 2: bidirectional LSTM over time with packed-sequence masking.
#   grid=(T,); step t -> forward dir at time t, reverse dir at time T-1-t.
# --------------------------------------------------------------------------- #
def bilstm_kernel(xf_ref, xb_ref, mf_ref, mb_ref,
                  wxf_ref, whf_ref, bf_ref,
                  wxb_ref, whb_ref, bb_ref,
                  outf_ref, outb_ref, hfinf_ref, hfinb_ref,
                  hf, cf, hb, cb):
    t = pl.program_id(0)
    nsteps = pl.num_programs(0)

    @pl.when(t == 0)
    def _():
        hf[...] = jnp.zeros_like(hf)
        cf[...] = jnp.zeros_like(cf)
        hb[...] = jnp.zeros_like(hb)
        cb[...] = jnp.zeros_like(cb)

    def lstm_step(x_t, h, c, wx_ref, wh_ref, b_ref):
        # Per-gate weights on a leading axis -> no lane-axis slicing of gates.
        def gate(k):
            return (jnp.dot(x_t, wx_ref[k], preferred_element_type=jnp.float32)
                    + jnp.dot(h, wh_ref[k], preferred_element_type=jnp.float32)
                    + b_ref[k])
        i = jax.nn.sigmoid(gate(0))
        f = jax.nn.sigmoid(gate(1))
        g = jnp.tanh(gate(2))
        o = jax.nn.sigmoid(gate(3))
        c_new = f * c + i * g
        h_new = o * jnp.tanh(c_new)
        return h_new, c_new

    # ---- forward direction, time index t ------------------------------------
    mf = mf_ref[0]                                            # [B, 1], 1.0 iff t < len
    h_new, c_new = lstm_step(xf_ref[0], hf[...], cf[...], wxf_ref, whf_ref, bf_ref)
    hf[...] = mf * h_new + (1.0 - mf) * hf[...]
    cf[...] = mf * c_new + (1.0 - mf) * cf[...]
    outf_ref[0] = mf * hf[...]                                # zeros at padded steps

    # ---- reverse direction, time index T-1-t ---------------------------------
    mb = mb_ref[0]
    h_new, c_new = lstm_step(xb_ref[0], hb[...], cb[...], wxb_ref, whb_ref, bb_ref)
    hb[...] = mb * h_new + (1.0 - mb) * hb[...]
    cb[...] = mb * c_new + (1.0 - mb) * cb[...]
    outb_ref[0] = mb * hb[...]

    @pl.when(t == nsteps - 1)
    def _():
        hfinf_ref[...] = hf[...]      # forward final hidden  (at t = len-1)
        hfinb_ref[...] = hb[...]      # reverse final hidden  (after t = 0)


# --------------------------------------------------------------------------- #
# Wrapper: layout plumbing (transposes / splits / masks) lives here, not in
# the kernels.
# --------------------------------------------------------------------------- #
def rnn_encoder_forward(captions, cap_lens, memory_emb, params):
    b, t_len = captions.shape
    table = params["embedding"]                               # [V, ninput]
    conv_w = params["conv_w"]                                 # [ninput, ninput+MDIM]
    ninput = table.shape[1]
    vocab = table.shape[0]
    nh = params["w_hh_f"].shape[1]
    mdim = memory_emb.shape[1]

    ids2d = captions.reshape(b * t_len, 1).astype(jnp.int32)
    mem2d = jnp.transpose(memory_emb, (0, 2, 1)).reshape(b * t_len, mdim)
    wcw = conv_w[:, :ninput].T                                # [ninput, ninput]
    wcm = conv_w[:, ninput:].T                                # [MDIM,   ninput]

    vmem = pltpu.MemorySpace.VMEM
    x_flat = pl.pallas_call(
        prep_kernel,
        out_shape=jax.ShapeDtypeStruct((b * t_len, ninput), jnp.float32),
        in_specs=[pl.BlockSpec(memory_space=vmem) for _ in range(5)],
        out_specs=pl.BlockSpec(memory_space=vmem),
        cost_estimate=pl.CostEstimate(
            flops=2 * b * t_len * ninput * (vocab + ninput + mdim),
            transcendentals=b * t_len * (ninput + mdim),
            bytes_accessed=4 * (b * t_len * (1 + mdim + 2 * ninput)
                                + vocab * ninput + (ninput + mdim) * ninput)),
    )(ids2d, table, mem2d, wcw, wcm)

    # time-major sequence for the recurrent kernel
    x_seq = jnp.transpose(x_flat.reshape(b, t_len, ninput), (1, 0, 2))  # [T,B,ninput]

    # Per-gate, pre-transposed LSTM weights (PyTorch gate order i,f,g,o kept).
    def prep_dir(w_ih, w_hh, b_ih, b_hh):
        wx = jnp.transpose(w_ih.reshape(4, nh, ninput), (0, 2, 1))  # [4, ninput, nh]
        wh = jnp.transpose(w_hh.reshape(4, nh, nh), (0, 2, 1))      # [4, nh, nh]
        bias = (b_ih + b_hh).reshape(4, 1, nh)                      # [4, 1, nh]
        return wx, wh, bias

    wxf, whf, bf = prep_dir(params["w_ih_f"], params["w_hh_f"],
                            params["b_ih_f"], params["b_hh_f"])
    wxb, whb, bb = prep_dir(params["w_ih_b"], params["w_hh_b"],
                            params["b_ih_b"], params["b_hh_b"])

    # packed-sequence validity mask: mask[t, b] = 1.0 iff t < cap_lens[b]
    mask = (jnp.arange(t_len)[:, None] < cap_lens[None, :]).astype(jnp.float32)
    mask = mask[:, :, None]                                         # [T, B, 1]

    fwd_x = pl.BlockSpec((1, b, ninput), lambda i: (i, 0, 0))
    bwd_x = pl.BlockSpec((1, b, ninput), lambda i: (t_len - 1 - i, 0, 0))
    fwd_m = pl.BlockSpec((1, b, 1), lambda i: (i, 0, 0))
    bwd_m = pl.BlockSpec((1, b, 1), lambda i: (t_len - 1 - i, 0, 0))

    def wspec(shape):
        return pl.BlockSpec(shape, lambda i: (0, 0, 0))

    out_f, out_b, hfin_f, hfin_b = pl.pallas_call(
        bilstm_kernel,
        grid=(t_len,),
        in_specs=[fwd_x, bwd_x, fwd_m, bwd_m,
                  wspec((4, ninput, nh)), wspec((4, nh, nh)), wspec((4, 1, nh)),
                  wspec((4, ninput, nh)), wspec((4, nh, nh)), wspec((4, 1, nh))],
        out_specs=(
            pl.BlockSpec((1, b, nh), lambda i: (i, 0, 0)),
            pl.BlockSpec((1, b, nh), lambda i: (t_len - 1 - i, 0, 0)),
            pl.BlockSpec((b, nh), lambda i: (0, 0)),
            pl.BlockSpec((b, nh), lambda i: (0, 0)),
        ),
        out_shape=(
            jax.ShapeDtypeStruct((t_len, b, nh), jnp.float32),
            jax.ShapeDtypeStruct((t_len, b, nh), jnp.float32),
            jax.ShapeDtypeStruct((b, nh), jnp.float32),
            jax.ShapeDtypeStruct((b, nh), jnp.float32),
        ),
        scratch_shapes=[pltpu.VMEM((b, nh), jnp.float32) for _ in range(4)],
        compiler_params=pltpu.CompilerParams(
            dimension_semantics=("arbitrary",)),
        cost_estimate=pl.CostEstimate(
            flops=t_len * 2 * 8 * b * nh * (ninput + nh),
            transcendentals=t_len * 2 * b * 5 * nh,
            bytes_accessed=4 * (t_len * b * (2 * ninput + 2 * nh + 2)
                                + 2 * 4 * nh * (ninput + nh + 1))),
    )(x_seq, x_seq, mask, mask, wxf, whf, bf, wxb, whb, bb)

    output = jnp.concatenate([out_f, out_b], axis=-1)               # [T, B, 2*nh]
    words_emb = jnp.transpose(output, (1, 2, 0))                    # [B, 2*nh, T]
    sent_emb = jnp.concatenate([hfin_f, hfin_b], axis=-1)           # [B, 2*nh]
    return words_emb, sent_emb


# --------------------------------------------------------------------------- #
# Pure-JAX reference mirroring the PyTorch module (packed-seq via masking).
# --------------------------------------------------------------------------- #
def reference_forward(captions, cap_lens, memory_emb, params):
    table = params["embedding"]
    conv_w = params["conv_w"]
    nh = params["w_hh_f"].shape[1]

    word = table[captions]                                          # [B, T, ninput]
    mem = jnp.transpose(memory_emb, (0, 2, 1))                      # [B, T, MDIM]
    emb = jnp.tanh(jnp.concatenate([word, mem], axis=-1))
    x = jnp.einsum("btc,oc->bto", emb, conv_w)                      # 1x1 conv, no bias

    def run_dir(w_ih, w_hh, b_ih, b_hh, reverse):
        bb, tt, _ = x.shape
        h = jnp.zeros((bb, nh), jnp.float32)
        c = jnp.zeros((bb, nh), jnp.float32)
        outs = [None] * tt
        steps = range(tt - 1, -1, -1) if reverse else range(tt)
        for step in steps:
            m = (step < cap_lens).astype(jnp.float32)[:, None]
            gates = x[:, step] @ w_ih.T + b_ih + h @ w_hh.T + b_hh
            gi, gf, gg, go = jnp.split(gates, 4, axis=-1)
            gi = jax.nn.sigmoid(gi)
            gf = jax.nn.sigmoid(gf)
            gg = jnp.tanh(gg)
            go = jax.nn.sigmoid(go)
            c_new = gf * c + gi * gg
            h_new = go * jnp.tanh(c_new)
            h = m * h_new + (1.0 - m) * h
            c = m * c_new + (1.0 - m) * c
            outs[step] = m * h
        return jnp.stack(outs, axis=1), h                           # [B,T,nh], [B,nh]

    of, hf = run_dir(params["w_ih_f"], params["w_hh_f"],
                     params["b_ih_f"], params["b_hh_f"], False)
    ob, hb = run_dir(params["w_ih_b"], params["w_hh_b"],
                     params["b_ih_b"], params["b_hh_b"], True)
    output = jnp.concatenate([of, ob], axis=-1)                     # [B, T, 2*nh]
    words_emb = jnp.transpose(output, (0, 2, 1))                    # [B, 2*nh, T]
    sent_emb = jnp.concatenate([hf, hb], axis=-1)                   # [B, 2*nh]
    return words_emb, sent_emb


if __name__ == "__main__":
    key = jax.random.PRNGKey(0)
    ks = jax.random.split(key, 12)

    captions = jax.random.randint(ks[0], (B, T), 0, VOCAB, dtype=jnp.int32)
    cap_lens = jnp.array([T, 5], dtype=jnp.int32)   # sorted desc (pack_padded req.)
    memory_emb = jax.random.normal(ks[1], (B, MDIM, T), dtype=jnp.float32)

    s = 0.1
    params = {
        "embedding": jax.random.normal(ks[2], (VOCAB, NINPUT), jnp.float32) * s,
        "conv_w": jax.random.uniform(ks[3], (NINPUT, NINPUT + MDIM),
                                     jnp.float32, -0.1, 0.1),
        "w_ih_f": jax.random.normal(ks[4], (4 * NHID, NINPUT), jnp.float32) * s,
        "w_hh_f": jax.random.normal(ks[5], (4 * NHID, NHID), jnp.float32) * s,
        "b_ih_f": jax.random.normal(ks[6], (4 * NHID,), jnp.float32) * s,
        "b_hh_f": jax.random.normal(ks[7], (4 * NHID,), jnp.float32) * s,
        "w_ih_b": jax.random.normal(ks[8], (4 * NHID, NINPUT), jnp.float32) * s,
        "w_hh_b": jax.random.normal(ks[9], (4 * NHID, NHID), jnp.float32) * s,
        "b_ih_b": jax.random.normal(ks[10], (4 * NHID,), jnp.float32) * s,
        "b_hh_b": jax.random.normal(ks[11], (4 * NHID,), jnp.float32) * s,
    }

    words_emb, sent_emb = rnn_encoder_forward(captions, cap_lens, memory_emb, params)
    jax.block_until_ready((words_emb, sent_emb))

    w_ref, s_ref = reference_forward(captions, cap_lens, memory_emb, params)
    assert words_emb.shape == (B, 2 * NHID, T)
    assert sent_emb.shape == (B, 2 * NHID)
    assert jnp.allclose(words_emb, w_ref, atol=1e-4, rtol=1e-4)
    assert jnp.allclose(sent_emb, s_ref, atol=1e-4, rtol=1e-4)
    print("KERNEL_OK")
</pallas_src>

<mosaic_0001>
module attributes {stable_mosaic.version = 11 : i64} {
  func.func @prep_kernel(%arg0: memref<16x1xi32, #tpu.memory_space<vmem>>, %arg1: memref<24x32xf32, #tpu.memory_space<vmem>>, %arg2: memref<16x256xf32, #tpu.memory_space<vmem>>, %arg3: memref<32x32xf32, #tpu.memory_space<vmem>>, %arg4: memref<256x32xf32, #tpu.memory_space<vmem>>, %arg5: memref<16x32xf32, #tpu.memory_space<vmem>>) attributes {dimension_semantics = [], scalar_prefetch = 0 : i64, scratch_operands = 0 : i64, tpu.core_type = #tpu.core_type<tc>} {
    %c0 = arith.constant 0 : index
    %c0_0 = arith.constant 0 : index
    %0 = vector.load %arg0[%c0, %c0_0] : memref<16x1xi32, #tpu.memory_space<vmem>>, vector<16x1xi32>
    %1 = tpu.iota {dimensions = array<i32: 1>} : vector<16x24xi32>
    %2 = vector.broadcast %0 : vector<16x1xi32> to vector<16x24xi32>
    %3 = arith.cmpi eq, %1, %2 : vector<16x24xi32>
    %4 = arith.extui %3 : vector<16x24xi1> to vector<16x24xi32>
    %5 = arith.sitofp %4 : vector<16x24xi32> to vector<16x24xf32>
    %c0_1 = arith.constant 0 : index
    %c0_2 = arith.constant 0 : index
    %6 = vector.load %arg1[%c0_1, %c0_2] : memref<24x32xf32, #tpu.memory_space<vmem>>, vector<24x32xf32>
    %cst = arith.constant dense<0.000000e+00> : vector<16x32xf32>
    %7 = tpu.matmul %5, %6, %cst {dimension_numbers = #tpu.dot_dimension_numbers<[1], [0], [0], [1], [0, 0, 1, 1], [], []>} : vector<16x24xf32>, vector<24x32xf32>, vector<16x32xf32> -> vector<16x32xf32>
    %8 = math.tanh %7 : vector<16x32xf32>
    %c0_3 = arith.constant 0 : index
    %c0_4 = arith.constant 0 : index
    %9 = vector.load %arg2[%c0_3, %c0_4] : memref<16x256xf32, #tpu.memory_space<vmem>>, vector<16x256xf32>
    %10 = math.tanh %9 : vector<16x256xf32>
    %c0_5 = arith.constant 0 : index
    %c0_6 = arith.constant 0 : index
    %11 = vector.load %arg3[%c0_5, %c0_6] : memref<32x32xf32, #tpu.memory_space<vmem>>, vector<32x32xf32>
    %cst_7 = arith.constant dense<0.000000e+00> : vector<16x32xf32>
    %12 = tpu.matmul %8, %11, %cst_7 {dimension_numbers = #tpu.dot_dimension_numbers<[1], [0], [0], [1], [0, 0, 1, 1], [], []>} : vector<16x32xf32>, vector<32x32xf32>, vector<16x32xf32> -> vector<16x32xf32>
    %c0_8 = arith.constant 0 : index
    %c0_9 = arith.constant 0 : index
    %13 = vector.load %arg4[%c0_8, %c0_9] : memref<256x32xf32, #tpu.memory_space<vmem>>, vector<256x32xf32>
    %cst_10 = arith.constant dense<0.000000e+00> : vector<16x32xf32>
    %14 = tpu.matmul %10, %13, %cst_10 {dimension_numbers = #tpu.dot_dimension_numbers<[1], [0], [0], [1], [0, 0, 1, 1], [], []>} : vector<16x256xf32>, vector<256x32xf32>, vector<16x32xf32> -> vector<16x32xf32>
    %15 = arith.addf %12, %14 : vector<16x32xf32>
    %c0_11 = arith.constant 0 : index
    %c0_12 = arith.constant 0 : index
    %16 = vector.load %arg5[%c0_11, %c0_12] : memref<16x32xf32, #tpu.memory_space<vmem>>, vector<16x32xf32>
    tpu.vector_store %arg5[%c0_11, %c0_12], %15 {strides = array<i32>} : memref<16x32xf32, #tpu.memory_space<vmem>>, vector<16x32xf32>,
    return
  }
}

</mosaic_0001>

<llo_original>
// kernel: tpu_custom_call.1
$region0: #{tpu_custom_call.1}
  #allocation0 [shape = 'u32[]', space=smem, size = 0x4, offset = 0x4, fixed_abs, tag = 'smem constant byte address 0x4 - core index']
  #allocation1 [shape = 'u32[72,128]{1,0:T(1,128)}', space=vmem, size = 0x9000, scoped, tag = 'internal scratch']
  %s0 = inlined_call_operand.vmem [shape: s32[16,1], index: 0, kind: input, shape index: {}]
  %s1 = inlined_call_operand.vmem [shape: f32[24,32], index: 1, kind: input, shape index: {}]
  %s2 = inlined_call_operand.vmem [shape: f32[16,256], index: 2, kind: input, shape index: {}]
  %s3 = inlined_call_operand.vmem [shape: f32[32,32], index: 3, kind: input, shape index: {}]
  %s4 = inlined_call_operand.vmem [shape: f32[256,32], index: 4, kind: input, shape index: {}]
  %s5 = inlined_call_operand.hbm [shape: f32[16,32], index: 5, kind: output, shape index: {}]
  %s6 = sld [smem:[#allocation0]]
  $region30: #{tpu_custom_call.1} parent=0
    _
  %s8 = ssub.s32 1, %s6
  %s9 = scalar_select 0, %s8, %s6
  $region1: #{tpu_custom_call.1} parent=0
    #allocation2 [shape = 'u8[8192]{0}', space=vmem, size = 0x2000, scoped, tag = 'output window, operand 0, single buffered']
    #allocation3 [shape = 's32[1]{0}', space=sflag, size = 0x4, scoped, tag = 'scoped memory for tpu_custom_call.1']
    %10 = vsyncpa [#allocation3], 0
    // Predicated region
    $region2: #{tpu_custom_call.1} parent=1 // pred_check
      _
    $region3: #{tpu_custom_call.1} parent=1 // pred_check_branch
      %12 = sbr.rel (0) target = $region5
    $region4: #{tpu_custom_call.1} parent=1 // pred_region
      _
    $region5: #{tpu_custom_call.1} parent=1 // pred_fallthru
      _
    // Predicated region
    $region6: #{tpu_custom_call.1} parent=1 // pred_check
      _
    $region7: #{tpu_custom_call.1} parent=1 // pred_check_branch
      %14 = sbr.rel (0) target = $region9
    $region8: #{tpu_custom_call.1} parent=1 // pred_region
      _
    $region9: #{tpu_custom_call.1} parent=1 // pred_fallthru
      _
    // Predicated region
    $region10: #{tpu_custom_call.1} parent=1 // pred_check
      _
    $region11: #{tpu_custom_call.1} parent=1 // pred_check_branch
      %16 = sbr.rel (0) target = $region13
    $region12: #{tpu_custom_call.1} parent=1 // pred_region
      _
    $region13: #{tpu_custom_call.1} parent=1 // pred_fallthru
      _
    // Predicated region
    $region14: #{tpu_custom_call.1} parent=1 // pred_check
      _
    $region15: #{tpu_custom_call.1} parent=1 // pred_check_branch
      %18 = sbr.rel (0) target = $region17
    $region16: #{tpu_custom_call.1} parent=1 // pred_region
      _
    $region17: #{tpu_custom_call.1} parent=1 // pred_fallthru
      _
    // Predicated region
    $region18: #{tpu_custom_call.1} parent=1 // pred_check
      _
    $region19: #{tpu_custom_call.1} parent=1 // pred_check_branch
      %20 = sbr.rel (0) target = $region21
    $region20: #{tpu_custom_call.1} parent=1 // pred_region
      _
    $region21: #{tpu_custom_call.1} parent=1 // pred_fallthru
      _
    %v21 = vld [vmem:[%s0] sm:$0xff]
    %v22 = vld [vmem:[%s0 + $0x8] sm:$0xff]
    %v23 = vlaneseq
    %v24 = vand.u32 %v23, 127
    %25 = vset.pattern.permute.xlu0 0
    %26 = vperm.xlu0 %25, %v21
    %v27 = vpop.permute.xlu0 %26
    %28 = vset.pattern.permute.xlu0 0
    %29 = vperm.xlu0 %28, %v22
    %v30 = vpop.permute.xlu0 %29
    %vm31 = vcmp.eq.s32.totalorder %v24, %v27
    %vm32 = vcmp.eq.s32.totalorder %v24, %v30
    %v33 = vsel %vm31, 1, 0
    %v34 = vsel %vm32, 1, 0
    %v35 = vcvt.s32.f32 %v33
    %v36 = vcvt.s32.f32 %v34
    %v37 = vld [vmem:[%s1] sm:$0xff]
    %v38 = vld [vmem:[%s1 + $0x8] sm:$0xff]
    %v39 = vld [vmem:[%s1 + $0x10] sm:$0xff]
    %vm40 = vcmask 195584
    %v42 = vsel %vm40, %v35, 0
    %v45 = vsel %vm40, %v36, 0
    %47 = vmatpush.msra.mxu0 0.0
    %48 = vmatpush.msra.mxu0 0.0
    %49 = vmatpush.msra.mxu0 0.0
    %50 = vmatpush.msra.mxu0 0.0
    %51 = vmatpush.msra.mxu0 0.0
    %52 = vmatpush.msra.mxu0 0.0
    %53 = vmatpush.msra.mxu0 0.0
    %54 = vmatpush.msra.mxu0 0.0
    %55 = vmatpush.msra.mxu0 0.0
    %56 = vmatpush.msra.mxu0 0.0
    %57 = vmatpush.msra.mxu0 0.0
    %58 = vmatpush.msra.mxu0 0.0
    %59 = vmatpush.msra.mxu0 0.0
    %60 = vmatpush.msra.mxu0 %v39
    %61 = vmatpush.msra.mxu0 %v38
    %62 = vmatpush.msra.mxu0 %v37
    %63 = vmatmul.f32.gmra.mxu0 %v42
    %v64 = vpop.f32.mrf.mxu0
    %v65 = vadd.f32 0.0, %v64
    %66 = vmatmul.f32.gmra.mxu0 %v45
    %v67 = vpop.f32.mrf.mxu0
    %v68 = vadd.f32 0.0, %v67
    %69 = vdwg.mxu0
    %v70 = vtanh.pop %v65
    %v71 = vtanh.pop %v68
    %v72 = vld [vmem:[%s2] sm:$0xff]
    %v73 = vld [vmem:[%s2 + $0x8] sm:$0xff]
    %v74 = vld [vmem:[%s2 + $0x10] sm:$0xff]
    %v75 = vld [vmem:[%s2 + $0x18] sm:$0xff]
    %v76 = vtanh.pop %v72
    %v77 = vtanh.pop %v73
    %v78 = vtanh.pop %v74
    %v79 = vtanh.pop %v75
    %v80 = vld [vmem:[%s3] sm:$0xff]
    %v81 = vld [vmem:[%s3 + $0x8] sm:$0xff]
    %v82 = vld [vmem:[%s3 + $0x10] sm:$0xff]
    %v83 = vld [vmem:[%s3 + $0x18] sm:$0xff]
    %v84 = vld [vmem:[%s4] sm:$0xff]
    %v85 = vld [vmem:[%s4 + $0x8] sm:$0xff]
    %v86 = vld [vmem:[%s4 + $0x10] sm:$0xff]
    %v87 = vld [vmem:[%s4 + $0x18] sm:$0xff]
    %v88 = vld [vmem:[%s4 + $0x20] sm:$0xff]
    %v89 = vld [vmem:[%s4 + $0x28] sm:$0xff]
    %v90 = vld [vmem:[%s4 + $0x30] sm:$0xff]
    %v91 = vld [vmem:[%s4 + $0x38] sm:$0xff]
    %v92 = vld [vmem:[%s4 + $0x40] sm:$0xff]
    %v93 = vld [vmem:[%s4 + $0x48] sm:$0xff]
    %v94 = vld [vmem:[%s4 + $0x50] sm:$0xff]
    %v95 = vld [vmem:[%s4 + $0x58] sm:$0xff]
    %v96 = vld [vmem:[%s4 + $0x60] sm:$0xff]
    %v97 = vld [vmem:[%s4 + $0x68] sm:$0xff]
    %v98 = vld [vmem:[%s4 + $0x70] sm:$0xff]
    %v99 = vld [vmem:[%s4 + $0x78] sm:$0xff]
    %v100 = vld [vmem:[%s4 + $0x80] sm:$0xff]
    %v101 = vld [vmem:[%s4 + $0x88] sm:$0xff]
    %v102 = vld [vmem:[%s4 + $0x90] sm:$0xff]
    %v103 = vld [vmem:[%s4 + $0x98] sm:$0xff]
    %v104 = vld [vmem:[%s4 + $0xa0] sm:$0xff]
    %v105 = vld [vmem:[%s4 + $0xa8] sm:$0xff]
    %v106 = vld [vmem:[%s4 + $0xb0] sm:$0xff]
    %v107 = vld [vmem:[%s4 + $0xb8] sm:$0xff]
    %v108 = vld [vmem:[%s4 + $0xc0] sm:$0xff]
    %v109 = vld [vmem:[%s4 + $0xc8] sm:$0xff]
    %v110 = vld [vmem:[%s4 + $0xd0] sm:$0xff]
    %v111 = vld [vmem:[%s4 + $0xd8] sm:$0xff]
    %v112 = vld [vmem:[%s4 + $0xe0] sm:$0xff]
    %v113 = vld [vmem:[%s4 + $0xe8] sm:$0xff]
    %v114 = vld [vmem:[%s4 + $0xf0] sm:$0xff]
    %v115 = vld [vmem:[%s4 + $0xf8] sm:$0xff]
    %116 = vmatpush.msra.mxu0 %v99
    %117 = vmatpush.msra.mxu0 %v98
    %118 = vmatpush.msra.mxu0 %v97
    %119 = vmatpush.msra.mxu0 %v96
    %120 = vmatpush.msra.mxu0 %v95
    %121 = vmatpush.msra.mxu0 %v94
    %122 = vmatpush.msra.mxu0 %v93
    %123 = vmatpush.msra.mxu0 %v92
    %124 = vmatpush.msra.mxu0 %v91
    %125 = vmatpush.msra.mxu0 %v90
    %126 = vmatpush.msra.mxu0 %v89
    %127 = vmatpush.msra.mxu0 %v88
    %128 = vmatpush.msra.mxu0 %v87
    %129 = vmatpush.msra.mxu0 %v86
    %130 = vmatpush.msra.mxu0 %v85
    %131 = vmatpush.msra.mxu0 %v84
    %132 = vmatmul.f32.gmra.mxu0 %v76
    %v133 = vpop.f32.mrf.mxu0
    %v134 = vadd.f32 0.0, %v133
    %135 = vmatmul.f32.gmra.mxu0 %v78
    %v136 = vpop.f32.mrf.mxu0
    %v137 = vadd.f32 0.0, %v136
    %138 = vdwg.mxu0
    %139 = vmatpush.msra.mxu0 %v115
    %140 = vmatpush.msra.mxu0 %v114
    %141 = vmatpush.msra.mxu0 %v113
    %142 = vmatpush.msra.mxu0 %v112
    %143 = vmatpush.msra.mxu0 %v111
    %144 = vmatpush.msra.mxu0 %v110
    %145 = vmatpush.msra.mxu0 %v109
    %146 = vmatpush.msra.mxu0 %v108
    %147 = vmatpush.msra.mxu0 %v107
    %148 = vmatpush.msra.mxu0 %v106
    %149 = vmatpush.msra.mxu0 %v105
    %150 = vmatpush.msra.mxu0 %v104
    %151 = vmatpush.msra.mxu0 %v103
    %152 = vmatpush.msra.mxu0 %v102
    %153 = vmatpush.msra.mxu0 %v101
    %154 = vmatpush.msra.mxu0 %v100
    %155 = vmatmul.f32.gmra.mxu0 %v77
    %v156 = vpop.f32.mrf.mxu0
    %v157 = vadd.f32 %v134, %v156
    %158 = vmatmul.f32.gmra.mxu0 %v79
    %v159 = vpop.f32.mrf.mxu0
    %v160 = vadd.f32 %v137, %v159
    %161 = vdwg.mxu0
    %vm162 = vcmask 261120
    %v164 = vsel %vm162, %v70, 0
    %v167 = vsel %vm162, %v71, 0
    %169 = vmatpush.msra.mxu0 0.0
    %170 = vmatpush.msra.mxu0 0.0
    %171 = vmatpush.msra.mxu0 0.0
    %172 = vmatpush.msra.mxu0 0.0
    %173 = vmatpush.msra.mxu0 0.0
    %174 = vmatpush.msra.mxu0 0.0
    %175 = vmatpush.msra.mxu0 0.0
    %176 = vmatpush.msra.mxu0 0.0
    %177 = vmatpush.msra.mxu0 0.0
    %178 = vmatpush.msra.mxu0 0.0
    %179 = vmatpush.msra.mxu0 0.0
    %180 = vmatpush.msra.mxu0 0.0
    %181 = vmatpush.msra.mxu0 %v83
    %182 = vmatpush.msra.mxu0 %v82
    %183 = vmatpush.msra.mxu0 %v81
    %184 = vmatpush.msra.mxu0 %v80
    %185 = vmatmul.f32.gmra.mxu0 %v164
    %v186 = vpop.f32.mrf.mxu0
    %v187 = vadd.f32 %v157, %v186
    %188 = vmatmul.f32.gmra.mxu0 %v167
    %v189 = vpop.f32.mrf.mxu0
    %v190 = vadd.f32 %v160, %v189
    %191 = vdwg.mxu0
    %192 = vst.msk [vmem:[#allocation2] sm:$0xff] %vm162, %v187
    %193 = vst.msk [vmem:[#allocation2 + $0x8] sm:$0xff] %vm162, %v190
    // Predicated region
    $region22: #{tpu_custom_call.1} parent=1 // pred_check
      _
    $region23: #{tpu_custom_call.1} parent=1 // pred_check_branch
      %195 = sbr.rel (0) target = $region25
    $region24: #{tpu_custom_call.1} parent=1 // pred_region
      %197 = vsyncadd [#allocation3], 0
      %s198 = sshll.u32 [#allocation2], 4
      %s199 = int_to_ptr.vmem [resolvable:$true] %s198
      %s200 = sshll.u32 %s5, 4
      %s201 = int_to_ptr.hbm [resolvable:$true] %s200
      %206 = dma.vmem_to_hbm [thread:$0]  %s199, 256, %s201, [#allocation3], 128, 128, 8
    $region25: #{tpu_custom_call.1} parent=1 // pred_fallthru
      _
    // Predicated region
    $region26: #{tpu_custom_call.1} parent=1 // pred_check
      _
    $region27: #{tpu_custom_call.1} parent=1 // pred_check_branch
      %208 = sbr.rel (0) target = $region29
    $region28: #{tpu_custom_call.1} parent=1 // pred_region
      %210 = dma.done [#allocation3], 256
    $region29: #{tpu_custom_call.1} parent=1 // pred_fallthru
      _
    %211 = vsyncpa [#allocation3], 1

</llo_original>
